<compile_context>
chip_gen: v7x
topology: tpu7x:2x2x1
jax: 0.10.0
libtpu: 0.0.40
codegen_flags: <defaults>
</compile_context>

<pallas_src>
import jax
import jax.numpy as jnp
from jax.experimental import pallas as pl
from jax.experimental.pallas import tpu as pltpu

V_TH = 1.0          # IFNode v_threshold
BN_EPS = 1e-5


def _full_spec(shape):
    # single grid point -> full-array block resident in VMEM
    return pl.BlockSpec(shape, lambda: (0,) * len(shape))


def make_fused_kernel(n_batch, c_out, howo, n_out):
    """Fused conv(+folded BN)+spike -> linear+spike kernel (single launch)."""

    def kernel(patches_ref, w1_ref, w2_ref, b2_ref, out_ref):
        # ---- layer 1: conv as one MXU matmul, threshold folded -> spike.
        # (Cout, K+1) @ (K+1, N*HoWo) -> (Cout, N*HoWo), lane-dense (512).
        z1 = jnp.dot(w1_ref[...], patches_ref[...],
                     preferred_element_type=jnp.float32)
        s = (z1 >= 0.0).astype(jnp.float32)              # spikes in {0, 1}

        # ---- layer 2: one channel-batched matmul, contraction over the
        # 256-wide lane dim of both operands (no rhs lane padding / masking).
        s3 = s.reshape(c_out, n_batch, howo)             # (Cout, N, HoWo)
        per_c = jnp.einsum('cnp,cop->cno', s3, w2_ref[...],
                           preferred_element_type=jnp.float32)   # (Cout, N, n_out)
        logits = jnp.sum(per_c, axis=0) + b2_ref[...]    # (N, n_out), bias-V_TH folded
        out_ref[...] = (logits >= 0.0).astype(out_ref.dtype)

    return kernel


@jax.jit
def net_forward(x_nchw, params):
    N, Cin, H, W = x_nchw.shape
    Cout = params["conv_w"].shape[0]
    KH = KW = 3
    stride = 2
    Ho = (H - KH) // stride + 1
    Wo = (W - KW) // stride + 1
    HoWo = Ho * Wo
    K1 = KH * KW * Cin
    n_out = params["lin_w"].shape[0]

    # ---- im2col: (K1, N*HoWo), lane-dense last dim.  K row order is
    # (kh, kw, cin); column index is j = n*HoWo + ho*Wo + wo.
    x = x_nchw.astype(jnp.float32)
    taps = []
    for kh in range(KH):
        for kw in range(KW):
            taps.append(x[:, :, kh:kh + stride * Ho:stride,
                          kw:kw + stride * Wo:stride])        # (N, Cin, Ho, Wo)
    patches = jnp.stack(taps, axis=0)                         # (9, N, Cin, Ho, Wo)
    patches = patches.transpose(0, 2, 1, 3, 4).reshape(K1, N * HoWo)
    patches_aug = jnp.concatenate(
        [patches, jnp.ones((1, N * HoWo), jnp.float32)], axis=0)   # (K1+1, 512)

    # ---- fold inference BN into conv weights; fold (BN bias - V_TH) in as an
    # extra weight column against the ones-row -> kernel compares `>= 0`.
    inv = jax.lax.rsqrt(params["bn_var"].astype(jnp.float32) + BN_EPS)
    scale = params["bn_gamma"].astype(jnp.float32) * inv                  # (Cout,)
    w1t = jnp.transpose(params["conv_w"].astype(jnp.float32),
                        (0, 2, 3, 1)).reshape(Cout, K1)                   # (Cout, K1)
    w1s = w1t * scale[:, None]
    b1 = (params["bn_beta"].astype(jnp.float32)
          - params["bn_mean"].astype(jnp.float32) * scale)                # (Cout,)
    w1_aug = jnp.concatenate([w1s, (b1 - V_TH)[:, None]], axis=1)         # (Cout, K1+1)

    # ---- Linear weight, lane-dense layout (Cout, n_out, HoWo); rows of
    # torch Flatten order f = c*HoWo + p become the per-channel lane dim.
    w2d = params["lin_w"].astype(jnp.float32).reshape(
        n_out, Cout, HoWo).transpose(1, 0, 2)                             # (Cout, n_out, HoWo)
    b2s = (params["lin_b"].astype(jnp.float32) - V_TH).reshape(1, n_out)

    flops = 2 * Cout * (K1 + 1) * (N * HoWo) + 2 * Cout * N * HoWo * n_out
    bytes_accessed = 4 * (patches_aug.size + w1_aug.size + w2d.size
                          + b2s.size + N * n_out)

    out = pl.pallas_call(
        make_fused_kernel(N, Cout, HoWo, n_out),
        out_shape=jax.ShapeDtypeStruct((N, n_out), jnp.float32),
        in_specs=[_full_spec((K1 + 1, N * HoWo)),
                  _full_spec((Cout, K1 + 1)),
                  _full_spec((Cout, n_out, HoWo)),
                  _full_spec((1, n_out))],
        out_specs=_full_spec((N, n_out)),
        compiler_params=pltpu.CompilerParams(
            allow_input_fusion=[True, False, False, False],
            vmem_limit_bytes=4 * 1024 * 1024),
        cost_estimate=pl.CostEstimate(flops=flops, transcendentals=0,
                                      bytes_accessed=bytes_accessed),
    )(patches_aug, w1_aug, w2d, b2s)
    return out


def net_forward_ref(x_nchw, params):
    """Pure-JAX/XLA reference of the same forward pass (for sanity check)."""
    z = jax.lax.conv_general_dilated(
        x_nchw.astype(jnp.float32), params["conv_w"].astype(jnp.float32),
        window_strides=(2, 2), padding="VALID",
        dimension_numbers=("NCHW", "OIHW", "NCHW"))
    inv = jax.lax.rsqrt(params["bn_var"].astype(jnp.float32) + BN_EPS)
    scale = (params["bn_gamma"].astype(jnp.float32) * inv)[None, :, None, None]
    z = (z - params["bn_mean"][None, :, None, None]) * scale \
        + params["bn_beta"][None, :, None, None]
    s = (z >= V_TH).astype(jnp.float32)
    feat = s.reshape(s.shape[0], -1)                      # torch Flatten (NCHW) order
    logits = feat @ params["lin_w"].astype(jnp.float32).T + params["lin_b"]
    return (logits >= V_TH).astype(jnp.float32)


if __name__ == "__main__":
    # Shapes consistent with the module: Linear expects 16*16*channels
    # features -> conv output 16x16 -> input spatial 33 (stride 2, k=3, pad 0).
    N, Cin, H, W = 2, 2, 33, 33
    Cout, n_out = 8, 10
    Ho = Wo = 16

    key = jax.random.PRNGKey(0)
    k_x, k_cw, k_bg, k_bb, k_lw, k_lb = jax.random.split(key, 6)

    x = jax.random.normal(k_x, (N, Cin, H, W), dtype=jnp.float32)

    params = {
        "conv_w": 0.3 * jax.random.normal(k_cw, (Cout, Cin, 3, 3),
                                          dtype=jnp.float32),
        "bn_gamma": 1.0 + 0.1 * jax.random.normal(k_bg, (Cout,),
                                                  dtype=jnp.float32),
        "bn_beta": 0.1 * jax.random.normal(k_bb, (Cout,), dtype=jnp.float32),
        "bn_mean": jnp.zeros((Cout,), dtype=jnp.float32),
        "bn_var": jnp.ones((Cout,), dtype=jnp.float32),
        "lin_w": 0.05 * jax.random.normal(k_lw, (n_out, Cout * Ho * Wo),
                                          dtype=jnp.float32),
        "lin_b": 0.05 * jax.random.normal(k_lb, (n_out,), dtype=jnp.float32),
    }

    out = jax.block_until_ready(net_forward(x, params))
    assert out.shape == (N, n_out) and out.dtype == jnp.float32
    assert bool(jnp.all((out == 0.0) | (out == 1.0)))

    # Sanity check vs pure-JAX reference.  Outputs are {0,1} spikes; allow a
    # couple of bit flips from exact-threshold FP ties (bias/threshold fold
    # changes summation order), but catch real wiring bugs (~50% mismatch).
    ref = jax.block_until_ready(net_forward_ref(x, params))
    mismatch_frac = float(jnp.mean(jnp.abs(out - ref)))
    assert mismatch_frac <= 0.2, f"spike mismatch fraction {mismatch_frac}"

    print("KERNEL_OK")
</pallas_src>

<mosaic_0001>
module attributes {stable_mosaic.version = 11 : i64} {
  func.func @kernel(%arg0: memref<19x512xf32, #tpu.memory_space<vmem>>, %arg1: memref<8x19xf32, #tpu.memory_space<vmem>>, %arg2: memref<8x10x256xf32, #tpu.memory_space<vmem>>, %arg3: memref<1x10xf32, #tpu.memory_space<vmem>>, %arg4: memref<2x10xf32, #tpu.memory_space<vmem>>) attributes {dimension_semantics = [], scalar_prefetch = 0 : i64, scratch_operands = 0 : i64, tpu.core_type = #tpu.core_type<tc>} {
    %c0 = arith.constant 0 : index
    %c0_0 = arith.constant 0 : index
    %0 = vector.load %arg1[%c0, %c0_0] : memref<8x19xf32, #tpu.memory_space<vmem>>, vector<8x19xf32>
    %c0_1 = arith.constant 0 : index
    %c0_2 = arith.constant 0 : index
    %1 = vector.load %arg0[%c0_1, %c0_2] : memref<19x512xf32, #tpu.memory_space<vmem>>, vector<19x512xf32>
    %cst = arith.constant dense<0.000000e+00> : vector<8x512xf32>
    %2 = tpu.matmul %0, %1, %cst {dimension_numbers = #tpu.dot_dimension_numbers<[1], [0], [0], [1], [0, 0, 1, 1], [], []>} : vector<8x19xf32>, vector<19x512xf32>, vector<8x512xf32> -> vector<8x512xf32>
    %cst_3 = arith.constant 0.000000e+00 : f32
    %3 = vector.broadcast %cst_3 : f32 to vector<8x512xf32>
    %4 = arith.cmpf oge, %2, %3 : vector<8x512xf32>
    %5 = arith.extui %4 : vector<8x512xi1> to vector<8x512xi32>
    %6 = arith.sitofp %5 : vector<8x512xi32> to vector<8x512xf32>
    %7 = vector.shape_cast %6 : vector<8x512xf32> to vector<8x2x256xf32>
    %c0_4 = arith.constant 0 : index
    %c0_5 = arith.constant 0 : index
    %c0_6 = arith.constant 0 : index
    %8 = vector.load %arg2[%c0_4, %c0_5, %c0_6] : memref<8x10x256xf32, #tpu.memory_space<vmem>>, vector<8x10x256xf32>
    "tpu.trace_start"() <{level = 10 : i32, message = "cnp,cop->cno"}> : () -> ()
    %cst_7 = arith.constant dense<0.000000e+00> : vector<8x2x10xf32>
    %9 = tpu.matmul %7, %8, %cst_7 {dimension_numbers = #tpu.dot_dimension_numbers<[2], [2], [1], [1], [0, 0, 0, 1, 1, 1], [0], [0]>} : vector<8x2x256xf32>, vector<8x10x256xf32>, vector<8x2x10xf32> -> vector<8x2x10xf32>
    "tpu.trace_stop"() : () -> ()
    %cst_8 = arith.constant dense<0.000000e+00> : vector<2x10xf32>
    %10 = vector.multi_reduction <add>, %9, %cst_8 [0] : vector<8x2x10xf32> to vector<2x10xf32>
    %c0_9 = arith.constant 0 : index
    %c0_10 = arith.constant 0 : index
    %11 = vector.load %arg3[%c0_9, %c0_10] : memref<1x10xf32, #tpu.memory_space<vmem>>, vector<1x10xf32>
    %12 = vector.broadcast %11 : vector<1x10xf32> to vector<2x10xf32>
    %13 = arith.addf %10, %12 : vector<2x10xf32>
    %cst_11 = arith.constant 0.000000e+00 : f32
    %14 = vector.broadcast %cst_11 : f32 to vector<2x10xf32>
    %15 = arith.cmpf oge, %13, %14 : vector<2x10xf32>
    %16 = arith.extui %15 : vector<2x10xi1> to vector<2x10xi32>
    %17 = arith.sitofp %16 : vector<2x10xi32> to vector<2x10xf32>
    %c0_12 = arith.constant 0 : index
    %c0_13 = arith.constant 0 : index
    %18 = vector.load %arg4[%c0_12, %c0_13] : memref<2x10xf32, #tpu.memory_space<vmem>>, vector<2x10xf32>
    tpu.vector_store %arg4[%c0_12, %c0_13], %17 {strides = array<i32>} : memref<2x10xf32, #tpu.memory_space<vmem>>, vector<2x10xf32>,
    return
  }
}

</mosaic_0001>

<llo_original>
// kernel: net_forward.2
$region0: #{net_forward.2}
  #allocation0 [shape = 'u32[]', space=smem, size = 0x4, offset = 0x4, fixed_abs, tag = 'smem constant byte address 0x4 - core index']
  #allocation1 [shape = 'u32[144,128]{1,0:T(1,128)}', space=vmem, size = 0x12000, scoped, tag = 'internal scratch']
  #allocation2 [shape = 'u32[2048]{0}', space=vmem, size = 0x2000, scoped, tag = 'scoped memory for net_forward.2']
  #allocation3 [shape = 'u32[2048]{0}', space=vmem, size = 0x2000, scoped, tag = 'scoped memory for net_forward.2']
  #allocation4 [shape = 'u32[2048]{0}', space=vmem, size = 0x2000, scoped, tag = 'scoped memory for net_forward.2']
  #allocation5 [shape = 'u32[2048]{0}', space=vmem, size = 0x2000, scoped, tag = 'scoped memory for net_forward.2']
  #allocation6 [shape = 'u32[2048]{0}', space=vmem, size = 0x2000, scoped, tag = 'scoped memory for net_forward.2']
  %s0 = inlined_call_operand.vmem [shape: f32[8,19], index: 0, kind: input, shape index: {}]
  %s1 = inlined_call_operand.vmem [shape: f32[8,10,256], index: 1, kind: input, shape index: {}]
  %s2 = inlined_call_operand.vmem [shape: f32[1,10], index: 2, kind: input, shape index: {}]
  %s3 = inlined_call_operand.vmem [shape: f32[18,512], index: 3, kind: input, shape index: {}]
  %s4 = inlined_call_operand.<no memory space> [shape: f32[], index: 4, kind: input, shape index: {}]
  %s5 = inlined_call_operand.hbm [shape: f32[2,10], index: 5, kind: output, shape index: {}]
  %s6 = sld [smem:[#allocation0]]
  $region26: #{net_forward.2} parent=0
    _
  %s8 = ssub.s32 1, %s6
  %s9 = scalar_select 0, %s8, %s6
  %v10 = vstv %s4
  $region1: #{net_forward.2} parent=0
    #allocation7 [shape = 'u8[1024]{0}', space=vmem, size = 0x400, scoped, tag = 'output window, operand 0, single buffered']
    #allocation8 [shape = 's32[1]{0}', space=sflag, size = 0x4, scoped, tag = 'scoped memory for net_forward.2']
    #allocation9 [shape = 'u8[49152]{0}', space=vmem, size = 0xc000, dematerialized = true, scoped, tag = 'FusionAdapter Buffer %fusion.1 = f32[19,512]{1,0:T(8,128)} fusion(%param_3.1, %param_4), kind=kLoop, calls=%fused_computation.2.clone, metadata={op_name="jit(net_forward)/concatenate" stack_frame_id=11}']
    %11 = vsyncpa [#allocation8], 0
    // Predicated region
    $region2: #{net_forward.2} parent=1 // pred_check
      _
    $region3: #{net_forward.2} parent=1 // pred_check_branch
      %13 = sbr.rel (0) target = $region5
    $region4: #{net_forward.2} parent=1 // pred_region
      _
    $region5: #{net_forward.2} parent=1 // pred_fallthru
      _
    // Predicated region
    $region6: #{net_forward.2} parent=1 // pred_check
      _
    $region7: #{net_forward.2} parent=1 // pred_check_branch
      %15 = sbr.rel (0) target = $region9
    $region8: #{net_forward.2} parent=1 // pred_region
      _
    $region9: #{net_forward.2} parent=1 // pred_fallthru
      _
    // Predicated region
    $region10: #{net_forward.2} parent=1 // pred_check
      _
    $region11: #{net_forward.2} parent=1 // pred_check_branch
      %17 = sbr.rel (0) target = $region13
    $region12: #{net_forward.2} parent=1 // pred_region
      _
    $region13: #{net_forward.2} parent=1 // pred_fallthru
      _
    // Predicated region
    $region14: #{net_forward.2} parent=1 // pred_check
      _
    $region15: #{net_forward.2} parent=1 // pred_check_branch
      %19 = sbr.rel (0) target = $region17
    $region16: #{net_forward.2} parent=1 // pred_region
      _
    $region17: #{net_forward.2} parent=1 // pred_fallthru
      _
    %v20 = vld [vmem:[%s3] sm:$0xff]
    %v21 = vlaneseq
    %v22 = vshrl.u32 %v21, 7
    %vm24 = vcmp.lt.s32.totalorder %v22, 18
    %v25 = vsel %vm24, %v20, %v10
    %27 = vst [vmem:[#allocation9] sm:$0xff] %v25
    %s28 = scalar_lea.vmem %s3, 8
    %v29 = vld [vmem:[%s28] sm:$0xff]
    %v30 = vlaneseq
    %v31 = vshrl.u32 %v30, 7
    %vm33 = vcmp.lt.s32.totalorder %v31, 18
    %v34 = vsel %vm33, %v29, %v10
    %s35 = scalar_lea.vmem [#allocation9], 8
    %37 = vst [vmem:[%s35] sm:$0xff] %v34
    %s38 = scalar_lea.vmem %s3, 16
    %v39 = vld [vmem:[%s38] sm:$0xff]
    %v40 = vlaneseq
    %v41 = vshrl.u32 %v40, 7
    %vm43 = vcmp.lt.s32.totalorder %v41, 18
    %v44 = vsel %vm43, %v39, %v10
    %s45 = scalar_lea.vmem [#allocation9], 16
    %47 = vst [vmem:[%s45] sm:$0xff] %v44
    %s48 = scalar_lea.vmem %s3, 24
    %v49 = vld [vmem:[%s48] sm:$0xff]
    %v50 = vlaneseq
    %v51 = vshrl.u32 %v50, 7
    %vm53 = vcmp.lt.s32.totalorder %v51, 18
    %v54 = vsel %vm53, %v49, %v10
    %s55 = scalar_lea.vmem [#allocation9], 24
    %57 = vst [vmem:[%s55] sm:$0xff] %v54
    %s58 = scalar_lea.vmem %s3, 32
    %v59 = vld [vmem:[%s58] sm:$0xff]
    %v60 = vlaneseq
    %v61 = vshrl.u32 %v60, 7
    %v62 = vadd.s32 %v61, 8
    %vm63 = vcmp.lt.s32.totalorder %v62, 18
    %v64 = vsel %vm63, %v59, %v10
    %s65 = scalar_lea.vmem [#allocation9], 32
    %67 = vst [vmem:[%s65] sm:$0xff] %v64
    %s68 = scalar_lea.vmem %s3, 40
    %v69 = vld [vmem:[%s68] sm:$0xff]
    %v70 = vlaneseq
    %v71 = vshrl.u32 %v70, 7
    %v72 = vadd.s32 %v71, 8
    %vm73 = vcmp.lt.s32.totalorder %v72, 18
    %v74 = vsel %vm73, %v69, %v10
    %s75 = scalar_lea.vmem [#allocation9], 40
    %77 = vst [vmem:[%s75] sm:$0xff] %v74
    %s78 = scalar_lea.vmem %s3, 48
    %v79 = vld [vmem:[%s78] sm:$0xff]
    %v80 = vlaneseq
    %v81 = vshrl.u32 %v80, 7
    %v82 = vadd.s32 %v81, 8
    %vm83 = vcmp.lt.s32.totalorder %v82, 18
    %v84 = vsel %vm83, %v79, %v10
    %s85 = scalar_lea.vmem [#allocation9], 48
    %87 = vst [vmem:[%s85] sm:$0xff] %v84
    %s88 = scalar_lea.vmem %s3, 56
    %v89 = vld [vmem:[%s88] sm:$0xff]
    %v90 = vlaneseq
    %v91 = vshrl.u32 %v90, 7
    %v92 = vadd.s32 %v91, 8
    %vm93 = vcmp.lt.s32.totalorder %v92, 18
    %v94 = vsel %vm93, %v89, %v10
    %s95 = scalar_lea.vmem [#allocation9], 56
    %97 = vst [vmem:[%s95] sm:$0xff] %v94
    %s98 = scalar_lea.vmem %s3, 64
    %v99 = vld [vmem:[%s98] sm:$0xff]
    %v100 = vlaneseq
    %v101 = vshrl.u32 %v100, 7
    %v102 = vadd.s32 %v101, 16
    %vm103 = vcmp.lt.s32.totalorder %v102, 18
    %v104 = vsel %vm103, %v99, %v10
    %s105 = scalar_lea.vmem [#allocation9], 64
    %107 = vst [vmem:[%s105] sm:$0xff] %v104
    %s108 = scalar_lea.vmem %s3, 72
    %v109 = vld [vmem:[%s108] sm:$0xff]
    %v110 = vlaneseq
    %v111 = vshrl.u32 %v110, 7
    %v112 = vadd.s32 %v111, 16
    %vm113 = vcmp.lt.s32.totalorder %v112, 18
    %v114 = vsel %vm113, %v109, %v10
    %s115 = scalar_lea.vmem [#allocation9], 72
    %117 = vst [vmem:[%s115] sm:$0xff] %v114
    %s118 = scalar_lea.vmem %s3, 80
    %v119 = vld [vmem:[%s118] sm:$0xff]
    %v120 = vlaneseq
    %v121 = vshrl.u32 %v120, 7
    %v122 = vadd.s32 %v121, 16
    %vm123 = vcmp.lt.s32.totalorder %v122, 18
    %v124 = vsel %vm123, %v119, %v10
    %s125 = scalar_lea.vmem [#allocation9], 80
    %127 = vst [vmem:[%s125] sm:$0xff] %v124
    %s128 = scalar_lea.vmem %s3, 88
    %v129 = vld [vmem:[%s128] sm:$0xff]
    %v130 = vlaneseq
    %v131 = vshrl.u32 %v130, 7
    %v132 = vadd.s32 %v131, 16
    %vm133 = vcmp.lt.s32.totalorder %v132, 18
    %v134 = vsel %vm133, %v129, %v10
    %s135 = scalar_lea.vmem [#allocation9], 88
    %137 = vst [vmem:[%s135] sm:$0xff] %v134
    %v138 = vld [vmem:[%s0] sm:$0xff]
    %v139 = vld [vmem:[#allocation9] sm:$0xff]
    %v140 = vld [vmem:[#allocation9 + $0x8] sm:$0xff]
    %v141 = vld [vmem:[#allocation9 + $0x10] sm:$0xff]
    %v142 = vld [vmem:[#allocation9 + $0x18] sm:$0xff]
    %v143 = vld [vmem:[#allocation9 + $0x20] sm:$0xff]
    %v144 = vld [vmem:[#allocation9 + $0x28] sm:$0xff]
    %v145 = vld [vmem:[#allocation9 + $0x30] sm:$0xff]
    %v146 = vld [vmem:[#allocation9 + $0x38] sm:$0xff]
    %v147 = vld [vmem:[#allocation9 + $0x40] sm:$0x7]
    %v148 = vld [vmem:[#allocation9 + $0x48] sm:$0x7]
    %v149 = vld [vmem:[#allocation9 + $0x50] sm:$0x7]
    %v150 = vld [vmem:[#allocation9 + $0x58] sm:$0x7]
    %vm151 = vcmask 154624
    %v153 = vsel %vm151, %v138, 0
    %vm155 = vcmask 1042432
    %v157 = vsel %vm155, %v147, 0
    %v160 = vsel %vm155, %v148, 0
    %v163 = vsel %vm155, %v149, 0
    %v166 = vsel %vm155, %v150, 0
    %168 = vmatprep.subr.mxu0 %v140
    %169 = vmatpush1.msra.mxu0 %v139
    %170 = vmatprep.subr.mxu0 %v144
    %171 = vmatpush1.msra.mxu0 %v143
    %172 = vmatprep.subr.mxu0 %v160
    %173 = vmatpush1.msra.mxu0 %v157
    %174 = vmatprep.subr.mxu0 0.0
    %175 = vmatpush1.msra.mxu0 0.0
    %176 = vmatprep.subr.mxu0 0.0
    %177 = vmatpush1.msra.mxu0 0.0
    %178 = vmatprep.subr.mxu0 0.0
    %179 = vmatpush1.msra.mxu0 0.0
    %180 = vmatprep.subr.mxu0 0.0
    %181 = vmatpush1.msra.mxu0 0.0
    %182 = vmatprep.subr.mxu0 0.0
    %183 = vmatpush1.msra.mxu0 0.0
    %184 = vmatprep.subr.mxu0 0.0
    %185 = vmatpush1.msra.mxu0 0.0
    %186 = vmatprep.subr.mxu0 0.0
    %187 = vmatpush1.msra.mxu0 0.0
    %188 = vmatprep.subr.mxu0 0.0
    %189 = vmatpush1.msra.mxu0 0.0
    %190 = vmatprep.subr.mxu0 0.0
    %191 = vmatpush1.msra.mxu0 0.0
    %192 = vmatprep.subr.mxu0 0.0
    %193 = vmatpush1.msra.mxu0 0.0
    %194 = vmatprep.subr.mxu0 0.0
    %195 = vmatpush1.msra.mxu0 0.0
    %196 = vmatprep.subr.mxu0 0.0
    %197 = vmatpush1.msra.mxu0 0.0
    %198 = vmatprep.subr.mxu0 0.0
    %199 = vmatpush1.msra.mxu0 0.0
    %200 = vmatprep.subr.mxu0 0.0
    %201 = vmatpush1.msra.mxu0 0.0
    %202 = vmatprep.subr.mxu0 0.0
    %203 = vmatpush1.msra.mxu0 0.0
    %204 = vmatprep.subr.mxu0 0.0
    %205 = vmatpush1.msra.mxu0 0.0
    %206 = vmatprep.subr.mxu0 0.0
    %207 = vmatpush1.msra.mxu0 0.0
    %208 = vmatprep.subr.mxu0 0.0
    %209 = vmatpush1.msra.mxu0 0.0
    %210 = vmatprep.subr.mxu0 0.0
    %211 = vmatpush1.msra.mxu0 0.0
    %212 = vmatprep.subr.mxu0 0.0
    %213 = vmatpush1.msra.mxu0 0.0
    %214 = vmatprep.subr.mxu0 0.0
    %215 = vmatpush1.msra.mxu0 0.0
    %216 = vmatprep.subr.mxu0 0.0
    %217 = vmatpush1.msra.mxu0 0.0
    %218 = vmatprep.subr.mxu0 0.0
    %219 = vmatpush1.msra.mxu0 0.0
    %220 = vmatprep.subr.mxu0 0.0
    %221 = vmatpush1.msra.mxu0 0.0
    %222 = vmatprep.subr.mxu0 0.0
    %223 = vmatpush1.msra.mxu0 0.0
    %224 = vmatprep.subr.mxu0 0.0
    %225 = vmatpush1.msra.mxu0 0.0
    %226 = vmatprep.subr.mxu0 0.0
    %227 = vmatpush1.msra.mxu0 0.0
    %228 = vmatprep.subr.mxu0 0.0
    %229 = vmatpush1.msra.mxu0 0.0
    %230 = vmatprep.subr.mxu0 0.0
    %231 = vmatpush1.msra.mxu0 0.0
    %232 = vmatprep.mubr.f32.mxu0 0.0
    %233 = vmatmul.mubr.f32.gmra.mrb[0].mxu0 %v153
    %v234 = vpop.f32.mrb[0].mxu0
    %v235 = vadd.f32 0.0, %v234
    %v236 = vpop.f32.mrb[0].mxu0
    %v237 = vadd.f32 0.0, %v236
    %238 = vdwg.mxu0
    %239 = vmatprep.subr.mxu0 %v142
    %240 = vmatpush1.msra.mxu0 %v141
    %241 = vmatprep.subr.mxu0 %v146
    %242 = vmatpush1.msra.mxu0 %v145
    %243 = vmatprep.subr.mxu0 %v166
    %244 = vmatpush1.msra.mxu0 %v163
    %245 = vmatprep.subr.mxu0 0.0
    %246 = vmatpush1.msra.mxu0 0.0
    %247 = vmatprep.subr.mxu0 0.0
    %248 = vmatpush1.msra.mxu0 0.0
    %249 = vmatprep.subr.mxu0 0.0
    %250 = vmatpush1.msra.mxu0 0.0
    %251 = vmatprep.subr.mxu0 0.0
    %252 = vmatpush1.msra.mxu0 0.0
    %253 = vmatprep.subr.mxu0 0.0
    %254 = vmatpush1.msra.mxu0 0.0
    %255 = vmatprep.subr.mxu0 0.0
    %256 = vmatpush1.msra.mxu0 0.0
    %257 = vmatprep.subr.mxu0 0.0
    %258 = vmatpush1.msra.mxu0 0.0
    %259 = vmatprep.subr.mxu0 0.0
    %260 = vmatpush1.msra.mxu0 0.0
    %261 = vmatprep.subr.mxu0 0.0
    %262 = vmatpush1.msra.mxu0 0.0
    %263 = vmatprep.subr.mxu0 0.0
    %264 = vmatpush1.msra.mxu0 0.0
    %265 = vmatprep.subr.mxu0 0.0
    %266 = vmatpush1.msra.mxu0 0.0
    %267 = vmatprep.subr.mxu0 0.0
    %268 = vmatpush1.msra.mxu0 0.0
    %269 = vmatprep.subr.mxu0 0.0
    %270 = vmatpush1.msra.mxu0 0.0
    %271 = vmatprep.subr.mxu0 0.0
    %272 = vmatpush1.msra.mxu0 0.0
    %273 = vmatprep.subr.mxu0 0.0
    %274 = vmatpush1.msra.mxu0 0.0
    %275 = vmatprep.subr.mxu0 0.0
    %276 = vmatpush1.msra.mxu0 0.0
    %277 = vmatprep.subr.mxu0 0.0
    %278 = vmatpush1.msra.mxu0 0.0
    %279 = vmatprep.subr.mxu0 0.0
    %280 = vmatpush1.msra.mxu0 0.0
    %281 = vmatprep.subr.mxu0 0.0
    %282 = vmatpush1.msra.mxu0 0.0
    %283 = vmatprep.subr.mxu0 0.0
    %284 = vmatpush1.msra.mxu0 0.0
    %285 = vmatprep.subr.mxu0 0.0
    %286 = vmatpush1.msra.mxu0 0.0
    %287 = vmatprep.subr.mxu0 0.0
    %288 = vmatpush1.msra.mxu0 0.0
    %289 = vmatprep.subr.mxu0 0.0
    %290 = vmatpush1.msra.mxu0 0.0
    %291 = vmatprep.subr.mxu0 0.0
    %292 = vmatpush1.msra.mxu0 0.0
    %293 = vmatprep.subr.mxu0 0.0
    %294 = vmatpush1.msra.mxu0 0.0
    %295 = vmatprep.subr.mxu0 0.0
    %296 = vmatpush1.msra.mxu0 0.0
    %297 = vmatprep.subr.mxu0 0.0
    %298 = vmatpush1.msra.mxu0 0.0
    %299 = vmatprep.subr.mxu0 0.0
    %300 = vmatpush1.msra.mxu0 0.0
    %301 = vmatprep.subr.mxu0 0.0
    %302 = vmatpush1.msra.mxu0 0.0
    %303 = vmatprep.mubr.f32.mxu0 0.0
    %304 = vmatmul.mubr.f32.gmra.mrb[0].mxu0 %v153
    %v305 = vpop.f32.mrb[0].mxu0
    %v306 = vadd.f32 0.0, %v305
    %v307 = vpop.f32.mrb[0].mxu0
    %v308 = vadd.f32 0.0, %v307
    %309 = vdwg.mxu0
    %vm310 = vcmp.ge.f32.partialorder %v235, 0.0
    %vm311 = vcmp.ge.f32.partialorder %v237, 0.0
    %vm312 = vcmp.ge.f32.partialorder %v306, 0.0
    %vm313 = vcmp.ge.f32.partialorder %v308, 0.0
    %v314 = vsel %vm310, 1, 0
    %v315 = vsel %vm311, 1, 0
    %v316 = vsel %vm312, 1, 0
    %v317 = vsel %vm313, 1, 0
    %v318 = vcvt.s32.f32 %v314
    %v319 = vcvt.s32.f32 %v315
    %v320 = vcvt.s32.f32 %v316
    %v321 = vcvt.s32.f32 %v317
    %v322 = vcombine.high %v318, 0.0
    %v324 = vunpack.c.l.s4 1983009808
    %v325 = vunpack.c.0.s8 %v324
    %v326 = vlaneseq
    %v327 = vshrl.u32 %v326, 7
    %v328 = vsub.s32 %v325, %v327
    %v329 = vrot.slane %v318, %v328
    %v331 = vunpack.c.l.s4 1983009808
    %v332 = vunpack.c.0.s8 %v331
    %v333 = vlaneseq
    %v334 = vshrl.u32 %v333, 7
    %v335 = vsub.s32 %v332, %v334
    %v336 = vrot.slane %v322, %v335
    %v337 = vcombine.high %v320, 0.0
    %v339 = vunpack.c.l.s4 1983009808
    %v340 = vunpack.c.0.s8 %v339
    %v341 = vlaneseq
    %v342 = vshrl.u32 %v341, 7
    %v343 = vsub.s32 %v340, %v342
    %v344 = vrot.slane %v320, %v343
    %v346 = vunpack.c.l.s4 1983009808
    %v347 = vunpack.c.0.s8 %v346
    %v348 = vlaneseq
    %v349 = vshrl.u32 %v348, 7
    %v350 = vsub.s32 %v347, %v349
    %v351 = vrot.slane %v337, %v350
    %v352 = vcombine.low %v329, %v344
    %v353 = vcombine.high %v329, %v344
    %v355 = vunpack.c.l.s4 1934713408
    %v356 = vunpack.c.0.s8 %v355
    %v357 = vlaneseq
    %v358 = vshrl.u32 %v357, 7
    %v359 = vsub.s32 %v356, %v358
    %v360 = vrot.slane %v352, %v359
    %v362 = vunpack.c.l.s4 1934713408
    %v363 = vunpack.c.0.s8 %v362
    %v364 = vlaneseq
    %v365 = vshrl.u32 %v364, 7
    %v366 = vsub.s32 %v363, %v365
    %v367 = vrot.slane %v353, %v366
    %v368 = vcombine.low %v336, %v351
    %v369 = vcombine.high %v336, %v351
    %v371 = vunpack.c.l.s4 1934713408
    %v372 = vunpack.c.0.s8 %v371
    %v373 = vlaneseq
    %v374 = vshrl.u32 %v373, 7
    %v375 = vsub.s32 %v372, %v374
    %v376 = vrot.slane %v368, %v375
    %v378 = vunpack.c.l.s4 1934713408
    %v379 = vunpack.c.0.s8 %v378
    %v380 = vlaneseq
    %v381 = vshrl.u32 %v380, 7
    %v382 = vsub.s32 %v379, %v381
    %v383 = vrot.slane %v369, %v382
    %v384 = vcombine.high %v360, 0.0
    %v385 = vcombine.high %v367, 0.0
    %v386 = vcombine.high %v376, 0.0
    %v387 = vcombine.high %v383, 0.0
    %v388 = vcombine.high %v319, 0.0
    %v390 = vunpack.c.l.s4 1983009808
    %v391 = vunpack.c.0.s8 %v390
    %v392 = vlaneseq
    %v393 = vshrl.u32 %v392, 7
    %v394 = vsub.s32 %v391, %v393
    %v395 = vrot.slane %v319, %v394
    %v397 = vunpack.c.l.s4 1983009808
    %v398 = vunpack.c.0.s8 %v397
    %v399 = vlaneseq
    %v400 = vshrl.u32 %v399, 7
    %v401 = vsub.s32 %v398, %v400
    %v402 = vrot.slane %v388, %v401
    %v403 = vcombine.high %v321, 0.0
    %v405 = vunpack.c.l.s4 1983009808
    %v406 = vunpack.c.0.s8 %v405
    %v407 = vlaneseq
    %v408 = vshrl.u32 %v407, 7
    %v409 = vsub.s32 %v406, %v408
    %v410 = vrot.slane %v321, %v409
    %v412 = vunpack.c.l.s4 1983009808
    %v413 = vunpack.c.0.s8 %v412
    %v414 = vlaneseq
    %v415 = vshrl.u32 %v414, 7
    %v416 = vsub.s32 %v413, %v415
    %v417 = vrot.slane %v403, %v416
    %v418 = vcombine.low %v395, %v410
    %v419 = vcombine.high %v395, %v410
    %v421 = vunpack.c.l.s4 1934713408
    %v422 = vunpack.c.0.s8 %v421
    %v423 = vlaneseq
    %v424 = vshrl.u32 %v423, 7
    %v425 = vsub.s32 %v422, %v424
    %v426 = vrot.slane %v418, %v425
    %v428 = vunpack.c.l.s4 1934713408
    %v429 = vunpack.c.0.s8 %v428
    %v430 = vlaneseq
    %v431 = vshrl.u32 %v430, 7
    %v432 = vsub.s32 %v429, %v431
    %v433 = vrot.slane %v419, %v432
    %v434 = vcombine.low %v402, %v417
    %v435 = vcombine.high %v402, %v417
    %v437 = vunpack.c.l.s4 1934713408
    %v438 = vunpack.c.0.s8 %v437
    %v439 = vlaneseq
    %v440 = vshrl.u32 %v439, 7
    %v441 = vsub.s32 %v438, %v440
    %v442 = vrot.slane %v434, %v441
    %v444 = vunpack.c.l.s4 1934713408
    %v445 = vunpack.c.0.s8 %v444
    %v446 = vlaneseq
    %v447 = vshrl.u32 %v446, 7
    %v448 = vsub.s32 %v445, %v447
    %v449 = vrot.slane %v435, %v448
    %v450 = vcombine.high %v426, 0.0
    %v451 = vcombine.high %v433, 0.0
    %v452 = vcombine.high %v442, 0.0
    %v453 = vcombine.high %v449, 0.0
    %v454 = vld [vmem:[%s1] sm:$0xff]
    %v455 = vld [vmem:[%s1 + $0x8] sm:$0xff]
    %v456 = vld [vmem:[%s1 + $0x10] sm:$0x3]
    %v457 = vld [vmem:[%s1 + $0x18] sm:$0x3]
    %v458 = vld [vmem:[%s1 + $0x20] sm:$0xff]
    %v459 = vld [vmem:[%s1 + $0x28] sm:$0xff]
    %v460 = vld [vmem:[%s1 + $0x30] sm:$0x3]
    %v461 = vld [vmem:[%s1 + $0x38] sm:$0x3]
    %v462 = vld [vmem:[%s1 + $0x40] sm:$0xff]
    %v463 = vld [vmem:[%s1 + $0x48] sm:$0xff]
    %v464 = vld [vmem:[%s1 + $0x50] sm:$0x3]
    %v465 = vld [vmem:[%s1 + $0x58] sm:$0x3]
    %v466 = vld [vmem:[%s1 + $0x60] sm:$0xff]
    %v467 = vld [vmem:[%s1 + $0x68] sm:$0xff]
    %v468 = vld [vmem:[%s1 + $0x70] sm:$0x3]
    %v469 = vld [vmem:[%s1 + $0x78] sm:$0x3]
    %v470 = vld [vmem:[%s1 + $0x80] sm:$0xff]
    %v471 = vld [vmem:[%s1 + $0x88] sm:$0xff]
    %v472 = vld [vmem:[%s1 + $0x90] sm:$0x3]
    %v473 = vld [vmem:[%s1 + $0x98] sm:$0x3]
    %v474 = vld [vmem:[%s1 + $0xa0] sm:$0xff]
    %v475 = vld [vmem:[%s1 + $0xa8] sm:$0xff]
    %v476 = vld [vmem:[%s1 + $0xb0] sm:$0x3]
    %v477 = vld [vmem:[%s1 + $0xb8] sm:$0x3]
    %v478 = vld [vmem:[%s1 + $0xc0] sm:$0xff]
    %v479 = vld [vmem:[%s1 + $0xc8] sm:$0xff]
    %v480 = vld [vmem:[%s1 + $0xd0] sm:$0x3]
    %v481 = vld [vmem:[%s1 + $0xd8] sm:$0x3]
    %v482 = vld [vmem:[%s1 + $0xe0] sm:$0xff]
    %v483 = vld [vmem:[%s1 + $0xe8] sm:$0xff]
    %v484 = vld [vmem:[%s1 + $0xf0] sm:$0x3]
    %v485 = vld [vmem:[%s1 + $0xf8] sm:$0x3]
    %486 = vmatprep.subr.mxu0 %v455
    %487 = vmatpush1.xpose.msra.mxu0 %v454
    %488 = vmatprep.subr.mxu0 %v457
    %489 = vmatpush1.xpose.msra.mxu0 %v456
    %490 = vmatprep.subr.mxu0 0.0
    %491 = vmatpush1.xpose.msra.mxu0 0.0
    %492 = vmatprep.subr.mxu0 0.0
    %493 = vmatpush1.xpose.msra.mxu0 0.0
    %494 = vmatprep.subr.mxu0 0.0
    %495 = vmatpush1.xpose.msra.mxu0 0.0
    %496 = vmatprep.subr.mxu0 0.0
    %497 = vmatpush1.xpose.msra.mxu0 0.0
    %498 = vmatprep.subr.mxu0 0.0
    %499 = vmatpush1.xpose.msra.mxu0 0.0
    %500 = vmatprep.subr.mxu0 0.0
    %501 = vmatpush1.xpose.msra.mxu0 0.0
    %502 = vmatprep.subr.mxu0 0.0
    %503 = vmatpush1.xpose.msra.mxu0 0.0
    %504 = vmatprep.subr.mxu0 0.0
    %505 = vmatpush1.xpose.msra.mxu0 0.0
    %506 = vmatprep.subr.mxu0 0.0
    %507 = vmatpush1.xpose.msra.mxu0 0.0
    %508 = vmatprep.subr.mxu0 0.0
    %509 = vmatpush1.xpose.msra.mxu0 0.0
    %510 = vmatprep.subr.mxu0 0.0
    %511 = vmatpush1.xpose.msra.mxu0 0.0
    %512 = vmatprep.subr.mxu0 0.0
    %513 = vmatpush1.xpose.msra.mxu0 0.0
    %514 = vmatprep.subr.mxu0 0.0
    %515 = vmatpush1.xpose.msra.mxu0 0.0
    %516 = vmatprep.subr.mxu0 0.0
    %517 = vmatpush1.xpose.msra.mxu0 0.0
    %518 = vmatprep.subr.mxu0 0.0
    %519 = vmatpush1.xpose.msra.mxu0 0.0
    %520 = vmatprep.subr.mxu0 0.0
    %521 = vmatpush1.xpose.msra.mxu0 0.0
    %522 = vmatprep.subr.mxu0 0.0
    %523 = vmatpush1.xpose.msra.mxu0 0.0
    %524 = vmatprep.subr.mxu0 0.0
    %525 = vmatpush1.xpose.msra.mxu0 0.0
    %526 = vmatprep.subr.mxu0 0.0
    %527 = vmatpush1.xpose.msra.mxu0 0.0
    %528 = vmatprep.subr.mxu0 0.0
    %529 = vmatpush1.xpose.msra.mxu0 0.0
    %530 = vmatprep.subr.mxu0 0.0
    %531 = vmatpush1.xpose.msra.mxu0 0.0
    %532 = vmatprep.subr.mxu0 0.0
    %533 = vmatpush1.xpose.msra.mxu0 0.0
    %534 = vmatprep.subr.mxu0 0.0
    %535 = vmatpush1.xpose.msra.mxu0 0.0
    %536 = vmatprep.subr.mxu0 0.0
    %537 = vmatpush1.xpose.msra.mxu0 0.0
    %538 = vmatprep.subr.mxu0 0.0
    %539 = vmatpush1.xpose.msra.mxu0 0.0
    %540 = vmatprep.subr.mxu0 0.0
    %541 = vmatpush1.xpose.msra.mxu0 0.0
    %542 = vmatprep.subr.mxu0 0.0
    %543 = vmatpush1.xpose.msra.mxu0 0.0
    %544 = vmatprep.subr.mxu0 0.0
    %545 = vmatpush1.xpose.msra.mxu0 0.0
    %546 = vmatprep.subr.mxu0 0.0
    %547 = vmatpush1.xpose.msra.mxu0 0.0
    %548 = vmatprep.subr.mxu0 0.0
    %549 = vmatpush1.xpose.msra.mxu0 0.0
    %550 = vmatprep.mubr.f32.mxu0 %v426
    %551 = vmatmul.mubr.f32.gmra.mrb[0].mxu0 %v360
    %v552 = vpop.f32.mrb[0].mxu0
    %v553 = vadd.f32 0.0, %v552
    %v554 = vpop.f32.mrb[0].mxu0
    %555 = vdwg.mxu0
    %556 = vmatprep.subr.mxu0 %v459
    %557 = vmatpush1.xpose.msra.mxu0 %v458
    %558 = vmatprep.subr.mxu0 %v461
    %559 = vmatpush1.xpose.msra.mxu0 %v460
    %560 = vmatprep.subr.mxu0 0.0
    %561 = vmatpush1.xpose.msra.mxu0 0.0
    %562 = vmatprep.subr.mxu0 0.0
    %563 = vmatpush1.xpose.msra.mxu0 0.0
    %564 = vmatprep.subr.mxu0 0.0
    %565 = vmatpush1.xpose.msra.mxu0 0.0
    %566 = vmatprep.subr.mxu0 0.0
    %567 = vmatpush1.xpose.msra.mxu0 0.0
    %568 = vmatprep.subr.mxu0 0.0
    %569 = vmatpush1.xpose.msra.mxu0 0.0
    %570 = vmatprep.subr.mxu0 0.0
    %571 = vmatpush1.xpose.msra.mxu0 0.0
    %572 = vmatprep.subr.mxu0 0.0
    %573 = vmatpush1.xpose.msra.mxu0 0.0
    %574 = vmatprep.subr.mxu0 0.0
    %575 = vmatpush1.xpose.msra.mxu0 0.0
    %576 = vmatprep.subr.mxu0 0.0
    %577 = vmatpush1.xpose.msra.mxu0 0.0
    %578 = vmatprep.subr.mxu0 0.0
    %579 = vmatpush1.xpose.msra.mxu0 0.0
    %580 = vmatprep.subr.mxu0 0.0
    %581 = vmatpush1.xpose.msra.mxu0 0.0
    %582 = vmatprep.subr.mxu0 0.0
    %583 = vmatpush1.xpose.msra.mxu0 0.0
    %584 = vmatprep.subr.mxu0 0.0
    %585 = vmatpush1.xpose.msra.mxu0 0.0
    %586 = vmatprep.subr.mxu0 0.0
    %587 = vmatpush1.xpose.msra.mxu0 0.0
    %588 = vmatprep.subr.mxu0 0.0
    %589 = vmatpush1.xpose.msra.mxu0 0.0
    %590 = vmatprep.subr.mxu0 0.0
    %591 = vmatpush1.xpose.msra.mxu0 0.0
    %592 = vmatprep.subr.mxu0 0.0
    %593 = vmatpush1.xpose.msra.mxu0 0.0
    %594 = vmatprep.subr.mxu0 0.0
    %595 = vmatpush1.xpose.msra.mxu0 0.0
    %596 = vmatprep.subr.mxu0 0.0
    %597 = vmatpush1.xpose.msra.mxu0 0.0
    %598 = vmatprep.subr.mxu0 0.0
    %599 = vmatpush1.xpose.msra.mxu0 0.0
    %600 = vmatprep.subr.mxu0 0.0
    %601 = vmatpush1.xpose.msra.mxu0 0.0
    %602 = vmatprep.subr.mxu0 0.0
    %603 = vmatpush1.xpose.msra.mxu0 0.0
    %604 = vmatprep.subr.mxu0 0.0
    %605 = vmatpush1.xpose.msra.mxu0 0.0
    %606 = vmatprep.subr.mxu0 0.0
    %607 = vmatpush1.xpose.msra.mxu0 0.0
    %608 = vmatprep.subr.mxu0 0.0
    %609 = vmatpush1.xpose.msra.mxu0 0.0
    %610 = vmatprep.subr.mxu0 0.0
    %611 = vmatpush1.xpose.msra.mxu0 0.0
    %612 = vmatprep.subr.mxu0 0.0
    %613 = vmatpush1.xpose.msra.mxu0 0.0
    %614 = vmatprep.subr.mxu0 0.0
    %615 = vmatpush1.xpose.msra.mxu0 0.0
    %616 = vmatprep.subr.mxu0 0.0
    %617 = vmatpush1.xpose.msra.mxu0 0.0
    %618 = vmatprep.subr.mxu0 0.0
    %619 = vmatpush1.xpose.msra.mxu0 0.0
    %620 = vmatprep.mubr.f32.mxu0 %v450
    %621 = vmatmul.mubr.f32.gmra.mrb[0].mxu0 %v384
    %v622 = vpop.f32.mrb[0].mxu0
    %v623 = vadd.f32 0.0, %v622
    %v624 = vpop.f32.mrb[0].mxu0
    %625 = vdwg.mxu0
    %626 = vmatprep.subr.mxu0 %v463
    %627 = vmatpush1.xpose.msra.mxu0 %v462
    %628 = vmatprep.subr.mxu0 %v465
    %629 = vmatpush1.xpose.msra.mxu0 %v464
    %630 = vmatprep.subr.mxu0 0.0
    %631 = vmatpush1.xpose.msra.mxu0 0.0
    %632 = vmatprep.subr.mxu0 0.0
    %633 = vmatpush1.xpose.msra.mxu0 0.0
    %634 = vmatprep.subr.mxu0 0.0
    %635 = vmatpush1.xpose.msra.mxu0 0.0
    %636 = vmatprep.subr.mxu0 0.0
    %637 = vmatpush1.xpose.msra.mxu0 0.0
    %638 = vmatprep.subr.mxu0 0.0
    %639 = vmatpush1.xpose.msra.mxu0 0.0
    %640 = vmatprep.subr.mxu0 0.0
    %641 = vmatpush1.xpose.msra.mxu0 0.0
    %642 = vmatprep.subr.mxu0 0.0
    %643 = vmatpush1.xpose.msra.mxu0 0.0
    %644 = vmatprep.subr.mxu0 0.0
    %645 = vmatpush1.xpose.msra.mxu0 0.0
    %646 = vmatprep.subr.mxu0 0.0
    %647 = vmatpush1.xpose.msra.mxu0 0.0
    %648 = vmatprep.subr.mxu0 0.0
    %649 = vmatpush1.xpose.msra.mxu0 0.0
    %650 = vmatprep.subr.mxu0 0.0
    %651 = vmatpush1.xpose.msra.mxu0 0.0
    %652 = vmatprep.subr.mxu0 0.0
    %653 = vmatpush1.xpose.msra.mxu0 0.0
    %654 = vmatprep.subr.mxu0 0.0
    %655 = vmatpush1.xpose.msra.mxu0 0.0
    %656 = vmatprep.subr.mxu0 0.0
    %657 = vmatpush1.xpose.msra.mxu0 0.0
    %658 = vmatprep.subr.mxu0 0.0
    %659 = vmatpush1.xpose.msra.mxu0 0.0
    %660 = vmatprep.subr.mxu0 0.0
    %661 = vmatpush1.xpose.msra.mxu0 0.0
    %662 = vmatprep.subr.mxu0 0.0
    %663 = vmatpush1.xpose.msra.mxu0 0.0
    %664 = vmatprep.subr.mxu0 0.0
    %665 = vmatpush1.xpose.msra.mxu0 0.0
    %666 = vmatprep.subr.mxu0 0.0
    %667 = vmatpush1.xpose.msra.mxu0 0.0
    %668 = vmatprep.subr.mxu0 0.0
    %669 = vmatpush1.xpose.msra.mxu0 0.0
    %670 = vmatprep.subr.mxu0 0.0
    %671 = vmatpush1.xpose.msra.mxu0 0.0
    %672 = vmatprep.subr.mxu0 0.0
    %673 = vmatpush1.xpose.msra.mxu0 0.0
    %674 = vmatprep.subr.mxu0 0.0
    %675 = vmatpush1.xpose.msra.mxu0 0.0
    %676 = vmatprep.subr.mxu0 0.0
    %677 = vmatpush1.xpose.msra.mxu0 0.0
    %678 = vmatprep.subr.mxu0 0.0
    %679 = vmatpush1.xpose.msra.mxu0 0.0
    %680 = vmatprep.subr.mxu0 0.0
    %681 = vmatpush1.xpose.msra.mxu0 0.0
    %682 = vmatprep.subr.mxu0 0.0
    %683 = vmatpush1.xpose.msra.mxu0 0.0
    %684 = vmatprep.subr.mxu0 0.0
    %685 = vmatpush1.xpose.msra.mxu0 0.0
    %686 = vmatprep.subr.mxu0 0.0
    %687 = vmatpush1.xpose.msra.mxu0 0.0
    %688 = vmatprep.subr.mxu0 0.0
    %689 = vmatpush1.xpose.msra.mxu0 0.0
    %690 = vmatprep.mubr.f32.mxu0 %v433
    %691 = vmatmul.mubr.f32.gmra.mrb[0].mxu0 %v367
    %v692 = vpop.f32.mrb[0].mxu0
    %v693 = vadd.f32 0.0, %v692
    %v694 = vpop.f32.mrb[0].mxu0
    %695 = vdwg.mxu0
    %696 = vmatprep.subr.mxu0 %v467
    %697 = vmatpush1.xpose.msra.mxu0 %v466
    %698 = vmatprep.subr.mxu0 %v469
    %699 = vmatpush1.xpose.msra.mxu0 %v468
    %700 = vmatprep.subr.mxu0 0.0
    %701 = vmatpush1.xpose.msra.mxu0 0.0
    %702 = vmatprep.subr.mxu0 0.0
    %703 = vmatpush1.xpose.msra.mxu0 0.0
    %704 = vmatprep.subr.mxu0 0.0
    %705 = vmatpush1.xpose.msra.mxu0 0.0
    %706 = vmatprep.subr.mxu0 0.0
    %707 = vmatpush1.xpose.msra.mxu0 0.0
    %708 = vmatprep.subr.mxu0 0.0
    %709 = vmatpush1.xpose.msra.mxu0 0.0
    %710 = vmatprep.subr.mxu0 0.0
    %711 = vmatpush1.xpose.msra.mxu0 0.0
    %712 = vmatprep.subr.mxu0 0.0
    %713 = vmatpush1.xpose.msra.mxu0 0.0
    %714 = vmatprep.subr.mxu0 0.0
    %715 = vmatpush1.xpose.msra.mxu0 0.0
    %716 = vmatprep.subr.mxu0 0.0
    %717 = vmatpush1.xpose.msra.mxu0 0.0
    %718 = vmatprep.subr.mxu0 0.0
    %719 = vmatpush1.xpose.msra.mxu0 0.0
    %720 = vmatprep.subr.mxu0 0.0
    %721 = vmatpush1.xpose.msra.mxu0 0.0
    %722 = vmatprep.subr.mxu0 0.0
    %723 = vmatpush1.xpose.msra.mxu0 0.0
    %724 = vmatprep.subr.mxu0 0.0
    %725 = vmatpush1.xpose.msra.mxu0 0.0
    %726 = vmatprep.subr.mxu0 0.0
    %727 = vmatpush1.xpose.msra.mxu0 0.0
    %728 = vmatprep.subr.mxu0 0.0
    %729 = vmatpush1.xpose.msra.mxu0 0.0
    %730 = vmatprep.subr.mxu0 0.0
    %731 = vmatpush1.xpose.msra.mxu0 0.0
    %732 = vmatprep.subr.mxu0 0.0
    %733 = vmatpush1.xpose.msra.mxu0 0.0
    %734 = vmatprep.subr.mxu0 0.0
    %735 = vmatpush1.xpose.msra.mxu0 0.0
    %736 = vmatprep.subr.mxu0 0.0
    %737 = vmatpush1.xpose.msra.mxu0 0.0
    %738 = vmatprep.subr.mxu0 0.0
    %739 = vmatpush1.xpose.msra.mxu0 0.0
    %740 = vmatprep.subr.mxu0 0.0
    %741 = vmatpush1.xpose.msra.mxu0 0.0
    %742 = vmatprep.subr.mxu0 0.0
    %743 = vmatpush1.xpose.msra.mxu0 0.0
    %744 = vmatprep.subr.mxu0 0.0
    %745 = vmatpush1.xpose.msra.mxu0 0.0
    %746 = vmatprep.subr.mxu0 0.0
    %747 = vmatpush1.xpose.msra.mxu0 0.0
    %748 = vmatprep.subr.mxu0 0.0
    %749 = vmatpush1.xpose.msra.mxu0 0.0
    %750 = vmatprep.subr.mxu0 0.0
    %751 = vmatpush1.xpose.msra.mxu0 0.0
    %752 = vmatprep.subr.mxu0 0.0
    %753 = vmatpush1.xpose.msra.mxu0 0.0
    %754 = vmatprep.subr.mxu0 0.0
    %755 = vmatpush1.xpose.msra.mxu0 0.0
    %756 = vmatprep.subr.mxu0 0.0
    %757 = vmatpush1.xpose.msra.mxu0 0.0
    %758 = vmatprep.subr.mxu0 0.0
    %759 = vmatpush1.xpose.msra.mxu0 0.0
    %760 = vmatprep.mubr.f32.mxu0 %v451
    %761 = vmatmul.mubr.f32.gmra.mrb[0].mxu0 %v385
    %v762 = vpop.f32.mrb[0].mxu0
    %v763 = vadd.f32 0.0, %v762
    %v764 = vpop.f32.mrb[0].mxu0
    %765 = vdwg.mxu0
    %766 = vmatprep.subr.mxu0 %v471
    %767 = vmatpush1.xpose.msra.mxu0 %v470
    %768 = vmatprep.subr.mxu0 %v473
    %769 = vmatpush1.xpose.msra.mxu0 %v472
    %770 = vmatprep.subr.mxu0 0.0
    %771 = vmatpush1.xpose.msra.mxu0 0.0
    %772 = vmatprep.subr.mxu0 0.0
    %773 = vmatpush1.xpose.msra.mxu0 0.0
    %774 = vmatprep.subr.mxu0 0.0
    %775 = vmatpush1.xpose.msra.mxu0 0.0
    %776 = vmatprep.subr.mxu0 0.0
    %777 = vmatpush1.xpose.msra.mxu0 0.0
    %778 = vmatprep.subr.mxu0 0.0
    %779 = vmatpush1.xpose.msra.mxu0 0.0
    %780 = vmatprep.subr.mxu0 0.0
    %781 = vmatpush1.xpose.msra.mxu0 0.0
    %782 = vmatprep.subr.mxu0 0.0
    %783 = vmatpush1.xpose.msra.mxu0 0.0
    %784 = vmatprep.subr.mxu0 0.0
    %785 = vmatpush1.xpose.msra.mxu0 0.0
    %786 = vmatprep.subr.mxu0 0.0
    %787 = vmatpush1.xpose.msra.mxu0 0.0
    %788 = vmatprep.subr.mxu0 0.0
    %789 = vmatpush1.xpose.msra.mxu0 0.0
    %790 = vmatprep.subr.mxu0 0.0
    %791 = vmatpush1.xpose.msra.mxu0 0.0
    %792 = vmatprep.subr.mxu0 0.0
    %793 = vmatpush1.xpose.msra.mxu0 0.0
    %794 = vmatprep.subr.mxu0 0.0
    %795 = vmatpush1.xpose.msra.mxu0 0.0
    %796 = vmatprep.subr.mxu0 0.0
    %797 = vmatpush1.xpose.msra.mxu0 0.0
    %798 = vmatprep.subr.mxu0 0.0
    %799 = vmatpush1.xpose.msra.mxu0 0.0
    %800 = vmatprep.subr.mxu0 0.0
    %801 = vmatpush1.xpose.msra.mxu0 0.0
    %802 = vmatprep.subr.mxu0 0.0
    %803 = vmatpush1.xpose.msra.mxu0 0.0
    %804 = vmatprep.subr.mxu0 0.0
    %805 = vmatpush1.xpose.msra.mxu0 0.0
    %806 = vmatprep.subr.mxu0 0.0
    %807 = vmatpush1.xpose.msra.mxu0 0.0
    %808 = vmatprep.subr.mxu0 0.0
    %809 = vmatpush1.xpose.msra.mxu0 0.0
    %810 = vmatprep.subr.mxu0 0.0
    %811 = vmatpush1.xpose.msra.mxu0 0.0
    %812 = vmatprep.subr.mxu0 0.0
    %813 = vmatpush1.xpose.msra.mxu0 0.0
    %814 = vmatprep.subr.mxu0 0.0
    %815 = vmatpush1.xpose.msra.mxu0 0.0
    %816 = vmatprep.subr.mxu0 0.0
    %817 = vmatpush1.xpose.msra.mxu0 0.0
    %818 = vmatprep.subr.mxu0 0.0
    %819 = vmatpush1.xpose.msra.mxu0 0.0
    %820 = vmatprep.subr.mxu0 0.0
    %821 = vmatpush1.xpose.msra.mxu0 0.0
    %822 = vmatprep.subr.mxu0 0.0
    %823 = vmatpush1.xpose.msra.mxu0 0.0
    %824 = vmatprep.subr.mxu0 0.0
    %825 = vmatpush1.xpose.msra.mxu0 0.0
    %826 = vmatprep.subr.mxu0 0.0
    %827 = vmatpush1.xpose.msra.mxu0 0.0
    %828 = vmatprep.subr.mxu0 0.0
    %829 = vmatpush1.xpose.msra.mxu0 0.0
    %830 = vmatprep.mubr.f32.mxu0 %v442
    %831 = vmatmul.mubr.f32.gmra.mrb[0].mxu0 %v376
    %v832 = vpop.f32.mrb[0].mxu0
    %v833 = vadd.f32 0.0, %v832
    %v834 = vpop.f32.mrb[0].mxu0
    %835 = vdwg.mxu0
    %836 = vmatprep.subr.mxu0 %v475
    %837 = vmatpush1.xpose.msra.mxu0 %v474
    %838 = vmatprep.subr.mxu0 %v477
    %839 = vmatpush1.xpose.msra.mxu0 %v476
    %840 = vmatprep.subr.mxu0 0.0
    %841 = vmatpush1.xpose.msra.mxu0 0.0
    %842 = vmatprep.subr.mxu0 0.0
    %843 = vmatpush1.xpose.msra.mxu0 0.0
    %844 = vmatprep.subr.mxu0 0.0
    %845 = vmatpush1.xpose.msra.mxu0 0.0
    %846 = vmatprep.subr.mxu0 0.0
    %847 = vmatpush1.xpose.msra.mxu0 0.0
    %848 = vmatprep.subr.mxu0 0.0
    %849 = vmatpush1.xpose.msra.mxu0 0.0
    %850 = vmatprep.subr.mxu0 0.0
    %851 = vmatpush1.xpose.msra.mxu0 0.0
    %852 = vmatprep.subr.mxu0 0.0
    %853 = vmatpush1.xpose.msra.mxu0 0.0
    %854 = vmatprep.subr.mxu0 0.0
    %855 = vmatpush1.xpose.msra.mxu0 0.0
    %856 = vmatprep.subr.mxu0 0.0
    %857 = vmatpush1.xpose.msra.mxu0 0.0
    %858 = vmatprep.subr.mxu0 0.0
    %859 = vmatpush1.xpose.msra.mxu0 0.0
    %860 = vmatprep.subr.mxu0 0.0
    %861 = vmatpush1.xpose.msra.mxu0 0.0
    %862 = vmatprep.subr.mxu0 0.0
    %863 = vmatpush1.xpose.msra.mxu0 0.0
    %864 = vmatprep.subr.mxu0 0.0
    %865 = vmatpush1.xpose.msra.mxu0 0.0
    %866 = vmatprep.subr.mxu0 0.0
    %867 = vmatpush1.xpose.msra.mxu0 0.0
    %868 = vmatprep.subr.mxu0 0.0
    %869 = vmatpush1.xpose.msra.mxu0 0.0
    %870 = vmatprep.subr.mxu0 0.0
    %871 = vmatpush1.xpose.msra.mxu0 0.0
    %872 = vmatprep.subr.mxu0 0.0
    %873 = vmatpush1.xpose.msra.mxu0 0.0
    %874 = vmatprep.subr.mxu0 0.0
    %875 = vmatpush1.xpose.msra.mxu0 0.0
    %876 = vmatprep.subr.mxu0 0.0
    %877 = vmatpush1.xpose.msra.mxu0 0.0
    %878 = vmatprep.subr.mxu0 0.0
    %879 = vmatpush1.xpose.msra.mxu0 0.0
    %880 = vmatprep.subr.mxu0 0.0
    %881 = vmatpush1.xpose.msra.mxu0 0.0
    %882 = vmatprep.subr.mxu0 0.0
    %883 = vmatpush1.xpose.msra.mxu0 0.0
    %884 = vmatprep.subr.mxu0 0.0
    %885 = vmatpush1.xpose.msra.mxu0 0.0
    %886 = vmatprep.subr.mxu0 0.0
    %887 = vmatpush1.xpose.msra.mxu0 0.0
    %888 = vmatprep.subr.mxu0 0.0
    %889 = vmatpush1.xpose.msra.mxu0 0.0
    %890 = vmatprep.subr.mxu0 0.0
    %891 = vmatpush1.xpose.msra.mxu0 0.0
    %892 = vmatprep.subr.mxu0 0.0
    %893 = vmatpush1.xpose.msra.mxu0 0.0
    %894 = vmatprep.subr.mxu0 0.0
    %895 = vmatpush1.xpose.msra.mxu0 0.0
    %896 = vmatprep.subr.mxu0 0.0
    %897 = vmatpush1.xpose.msra.mxu0 0.0
    %898 = vmatprep.subr.mxu0 0.0
    %899 = vmatpush1.xpose.msra.mxu0 0.0
    %900 = vmatprep.mubr.f32.mxu0 %v452
    %901 = vmatmul.mubr.f32.gmra.mrb[0].mxu0 %v386
    %v902 = vpop.f32.mrb[0].mxu0
    %v903 = vadd.f32 0.0, %v902
    %v904 = vpop.f32.mrb[0].mxu0
    %905 = vdwg.mxu0
    %906 = vmatprep.subr.mxu0 %v479
    %907 = vmatpush1.xpose.msra.mxu0 %v478
    %908 = vmatprep.subr.mxu0 %v481
    %909 = vmatpush1.xpose.msra.mxu0 %v480
    %910 = vmatprep.subr.mxu0 0.0
    %911 = vmatpush1.xpose.msra.mxu0 0.0
    %912 = vmatprep.subr.mxu0 0.0
    %913 = vmatpush1.xpose.msra.mxu0 0.0
    %914 = vmatprep.subr.mxu0 0.0
    %915 = vmatpush1.xpose.msra.mxu0 0.0
    %916 = vmatprep.subr.mxu0 0.0
    %917 = vmatpush1.xpose.msra.mxu0 0.0
    %918 = vmatprep.subr.mxu0 0.0
    %919 = vmatpush1.xpose.msra.mxu0 0.0
    %920 = vmatprep.subr.mxu0 0.0
    %921 = vmatpush1.xpose.msra.mxu0 0.0
    %922 = vmatprep.subr.mxu0 0.0
    %923 = vmatpush1.xpose.msra.mxu0 0.0
    %924 = vmatprep.subr.mxu0 0.0
    %925 = vmatpush1.xpose.msra.mxu0 0.0
    %926 = vmatprep.subr.mxu0 0.0
    %927 = vmatpush1.xpose.msra.mxu0 0.0
    %928 = vmatprep.subr.mxu0 0.0
    %929 = vmatpush1.xpose.msra.mxu0 0.0
    %930 = vmatprep.subr.mxu0 0.0
    %931 = vmatpush1.xpose.msra.mxu0 0.0
    %932 = vmatprep.subr.mxu0 0.0
    %933 = vmatpush1.xpose.msra.mxu0 0.0
    %934 = vmatprep.subr.mxu0 0.0
    %935 = vmatpush1.xpose.msra.mxu0 0.0
    %936 = vmatprep.subr.mxu0 0.0
    %937 = vmatpush1.xpose.msra.mxu0 0.0
    %938 = vmatprep.subr.mxu0 0.0
    %939 = vmatpush1.xpose.msra.mxu0 0.0
    %940 = vmatprep.subr.mxu0 0.0
    %941 = vmatpush1.xpose.msra.mxu0 0.0
    %942 = vmatprep.subr.mxu0 0.0
    %943 = vmatpush1.xpose.msra.mxu0 0.0
    %944 = vmatprep.subr.mxu0 0.0
    %945 = vmatpush1.xpose.msra.mxu0 0.0
    %946 = vmatprep.subr.mxu0 0.0
    %947 = vmatpush1.xpose.msra.mxu0 0.0
    %948 = vmatprep.subr.mxu0 0.0
    %949 = vmatpush1.xpose.msra.mxu0 0.0
    %950 = vmatprep.subr.mxu0 0.0
    %951 = vmatpush1.xpose.msra.mxu0 0.0
    %952 = vmatprep.subr.mxu0 0.0
    %953 = vmatpush1.xpose.msra.mxu0 0.0
    %954 = vmatprep.subr.mxu0 0.0
    %955 = vmatpush1.xpose.msra.mxu0 0.0
    %956 = vmatprep.subr.mxu0 0.0
    %957 = vmatpush1.xpose.msra.mxu0 0.0
    %958 = vmatprep.subr.mxu0 0.0
    %959 = vmatpush1.xpose.msra.mxu0 0.0
    %960 = vmatprep.subr.mxu0 0.0
    %961 = vmatpush1.xpose.msra.mxu0 0.0
    %962 = vmatprep.subr.mxu0 0.0
    %963 = vmatpush1.xpose.msra.mxu0 0.0
    %964 = vmatprep.subr.mxu0 0.0
    %965 = vmatpush1.xpose.msra.mxu0 0.0
    %966 = vmatprep.subr.mxu0 0.0
    %967 = vmatpush1.xpose.msra.mxu0 0.0
    %968 = vmatprep.subr.mxu0 0.0
    %969 = vmatpush1.xpose.msra.mxu0 0.0
    %970 = vmatprep.mubr.f32.mxu0 %v449
    %971 = vmatmul.mubr.f32.gmra.mrb[0].mxu0 %v383
    %v972 = vpop.f32.mrb[0].mxu0
    %v973 = vadd.f32 0.0, %v972
    %v974 = vpop.f32.mrb[0].mxu0
    %975 = vdwg.mxu0
    %976 = vmatprep.subr.mxu0 %v483
    %977 = vmatpush1.xpose.msra.mxu0 %v482
    %978 = vmatprep.subr.mxu0 %v485
    %979 = vmatpush1.xpose.msra.mxu0 %v484
    %980 = vmatprep.subr.mxu0 0.0
    %981 = vmatpush1.xpose.msra.mxu0 0.0
    %982 = vmatprep.subr.mxu0 0.0
    %983 = vmatpush1.xpose.msra.mxu0 0.0
    %984 = vmatprep.subr.mxu0 0.0
    %985 = vmatpush1.xpose.msra.mxu0 0.0
    %986 = vmatprep.subr.mxu0 0.0
    %987 = vmatpush1.xpose.msra.mxu0 0.0
    %988 = vmatprep.subr.mxu0 0.0
    %989 = vmatpush1.xpose.msra.mxu0 0.0
    %990 = vmatprep.subr.mxu0 0.0
    %991 = vmatpush1.xpose.msra.mxu0 0.0
    %992 = vmatprep.subr.mxu0 0.0
    %993 = vmatpush1.xpose.msra.mxu0 0.0
    %994 = vmatprep.subr.mxu0 0.0
    %995 = vmatpush1.xpose.msra.mxu0 0.0
    %996 = vmatprep.subr.mxu0 0.0
    %997 = vmatpush1.xpose.msra.mxu0 0.0
    %998 = vmatprep.subr.mxu0 0.0
    %999 = vmatpush1.xpose.msra.mxu0 0.0
    %1000 = vmatprep.subr.mxu0 0.0
    %1001 = vmatpush1.xpose.msra.mxu0 0.0
    %1002 = vmatprep.subr.mxu0 0.0
    %1003 = vmatpush1.xpose.msra.mxu0 0.0
    %1004 = vmatprep.subr.mxu0 0.0
    %1005 = vmatpush1.xpose.msra.mxu0 0.0
    %1006 = vmatprep.subr.mxu0 0.0
    %1007 = vmatpush1.xpose.msra.mxu0 0.0
    %1008 = vmatprep.subr.mxu0 0.0
    %1009 = vmatpush1.xpose.msra.mxu0 0.0
    %1010 = vmatprep.subr.mxu0 0.0
    %1011 = vmatpush1.xpose.msra.mxu0 0.0
    %1012 = vmatprep.subr.mxu0 0.0
    %1013 = vmatpush1.xpose.msra.mxu0 0.0
    %1014 = vmatprep.subr.mxu0 0.0
    %1015 = vmatpush1.xpose.msra.mxu0 0.0
    %1016 = vmatprep.subr.mxu0 0.0
    %1017 = vmatpush1.xpose.msra.mxu0 0.0
    %1018 = vmatprep.subr.mxu0 0.0
    %1019 = vmatpush1.xpose.msra.mxu0 0.0
    %1020 = vmatprep.subr.mxu0 0.0
    %1021 = vmatpush1.xpose.msra.mxu0 0.0
    %1022 = vmatprep.subr.mxu0 0.0
    %1023 = vmatpush1.xpose.msra.mxu0 0.0
    %1024 = vmatprep.subr.mxu0 0.0
    %1025 = vmatpush1.xpose.msra.mxu0 0.0
    %1026 = vmatprep.subr.mxu0 0.0
    %1027 = vmatpush1.xpose.msra.mxu0 0.0
    %1028 = vmatprep.subr.mxu0 0.0
    %1029 = vmatpush1.xpose.msra.mxu0 0.0
    %1030 = vmatprep.subr.mxu0 0.0
    %1031 = vmatpush1.xpose.msra.mxu0 0.0
    %1032 = vmatprep.subr.mxu0 0.0
    %1033 = vmatpush1.xpose.msra.mxu0 0.0
    %1034 = vmatprep.subr.mxu0 0.0
    %1035 = vmatpush1.xpose.msra.mxu0 0.0
    %1036 = vmatprep.subr.mxu0 0.0
    %1037 = vmatpush1.xpose.msra.mxu0 0.0
    %1038 = vmatprep.subr.mxu0 0.0
    %1039 = vmatpush1.xpose.msra.mxu0 0.0
    %1040 = vmatprep.mubr.f32.mxu0 %v453
    %1041 = vmatmul.mubr.f32.gmra.mrb[0].mxu0 %v387
    %v1042 = vpop.f32.mrb[0].mxu0
    %v1043 = vadd.f32 0.0, %v1042
    %v1044 = vpop.f32.mrb[0].mxu0
    %1045 = vdwg.mxu0
    %vm1046 = vcmask 74752
    %v1047 = vsel %vm1046, %v553, 0.0
    %v1048 = vsel %vm1046, %v623, 0.0
    %v1049 = vadd.f32 %v1047, %v1048
    %v1050 = vsel %vm1046, %v693, 0.0
    %v1051 = vadd.f32 %v1049, %v1050
    %v1052 = vsel %vm1046, %v763, 0.0
    %v1053 = vadd.f32 %v1051, %v1052
    %v1054 = vsel %vm1046, %v833, 0.0
    %v1055 = vadd.f32 %v1053, %v1054
    %v1056 = vsel %vm1046, %v903, 0.0
    %v1057 = vadd.f32 %v1055, %v1056
    %v1058 = vsel %vm1046, %v973, 0.0
    %v1059 = vadd.f32 %v1057, %v1058
    %v1060 = vsel %vm1046, %v1043, 0.0
    %v1061 = vadd.f32 %v1059, %v1060
    %v1062 = vld [vmem:[%s2] sm:$0x1]
    %v1064 = vlaneseq
    %v1065 = vshrl.u32 %v1064, 7
    %v1066 = vsub.s32 0, %v1065
    %v1067 = vrot.slane %v1062, %v1066
    %v1069 = vadd.f32 %v1061, %v1067
    %vm1070 = vcmp.ge.f32.partialorder %v1069, 0.0
    %v1071 = vsel %vm1070, 1, 0
    %v1072 = vcvt.s32.f32 %v1071
    %1073 = vst.msk [vmem:[#allocation7] sm:$0x3] %vm1046, %v1072
    // Predicated region
    $region18: #{net_forward.2} parent=1 // pred_check
      _
    $region19: #{net_forward.2} parent=1 // pred_check_branch
      %1075 = sbr.rel (0) target = $region21
    $region20: #{net_forward.2} parent=1 // pred_region
      %s1077 = ssub.s32 32, 32
      %1078 = vsyncadd [#allocation8], %s1077
      %s1080 = sshll.u32 [#allocation7], 4
      %s1081 = int_to_ptr.vmem [resolvable:$true] %s1080
      %1083 = dma.vmem_to_hbm [thread:$0]  %s1081, 32, %s5, [#allocation8]
    $region21: #{net_forward.2} parent=1 // pred_fallthru
      _
    // Predicated region
    $region22: #{net_forward.2} parent=1 // pred_check
      _
    $region23: #{net_forward.2} parent=1 // pred_check_branch
      %1085 = sbr.rel (0) target = $region25
    $region24: #{net_forward.2} parent=1 // pred_region
      %1086 = dma.done [#allocation8], 32
    $region25: #{net_forward.2} parent=1 // pred_fallthru
      _
    %1087 = vsyncpa [#allocation8], 1

</llo_original>
